<compile_context>
chip_gen: v5e
topology: v5e:2x2
jax: 0.10.0
libtpu: 0.0.40
codegen_flags: <defaults>
</compile_context>

<pallas_src>
import functools
import jax
import jax.numpy as jnp
from jax import lax
from jax.experimental import pallas as pl
from jax.experimental.pallas import tpu as pltpu


def _round_up(x, m):
    return (x + m - 1) // m * m


# ------------------------------------------------------------------ kernel ---
def _make_kernel(k, d, Wp, kk, cin_p, m_t, act, slope=0.1):
    def kernel(x0_ref, x1_ref, w_ref, shift_ref, o_ref, win_ref, xcol_ref):
        # x0_ref:    (1, cin_p, m_t)     bf16  lane tile of the flat padded image
        # x1_ref:    (1, cin_p, h_t)     bf16  right halo (covers every tap shift)
        # w_ref:     (cout_t, kk*cin_p)  bf16  BN-scale-folded, im2col-ordered W
        # shift_ref: (cout_t, 1)         f32   folded BN shift
        # o_ref:     (1, cout_t, m_t)          lane-dense output tile
        # win_ref:   (cin_p, m_t + h_t)  bf16  scratch: contiguous tile + halo
        # xcol_ref:  (kk*cin_p, m_t)     bf16  scratch: staged im2col operand
        win_ref[:, :m_t] = x0_ref[0]               # aligned full-block copies
        win_ref[:, m_t:] = x1_ref[0]

        # Stage the k*k statically shifted windows (static offsets -> lane
        # rotates on the XLU, overlapping with the MXU of neighboring steps).
        for i in range(kk):                        # fully unrolled
            dy, dx = divmod(i, k)
            off = (dy * Wp + dx) * d               # static, <= halo
            xcol_ref[i * cin_p:(i + 1) * cin_p, :] = win_ref[:, off:off + m_t]

        # Single fused contraction: K = k*k*Cin_p (instead of k*k matmuls of K=Cin).
        acc = jnp.dot(w_ref[...], xcol_ref[...],
                      preferred_element_type=jnp.float32)
        y = acc + shift_ref[...]
        if act:
            y = jnp.where(y > 0, y, slope * y)     # LeakyReLU(0.1)
        o_ref[0] = y.astype(o_ref.dtype)

    return kernel


# ------------------------------------------------------------------- glue ----
@functools.partial(jax.jit, static_argnames=("k", "p", "s", "d", "act", "eps",
                                             "out_dtype", "m_tile_target"))
def conv_bn_lrelu(x, weight, gamma, beta, running_mean, running_var, *,
                  k, p=0, s=1, d=1, act=True, eps=1e-5,
                  out_dtype=jnp.bfloat16, m_tile_target=512):
    """Forward of the PyTorch `Conv` module (bias=False, groups=1)."""
    # TODO(synk): groups > 1 and bias=True not implemented (module defaults g=1, bias=False).
    N, Cin, H, W = x.shape
    Cout = weight.shape[0]
    kk = k * k

    Hp, Wp = H + 2 * p, W + 2 * p
    Ho = (Hp - d * (k - 1) - 1) // s + 1
    Wo = (Wp - d * (k - 1) - 1) // s + 1
    Ho1 = Hp - d * (k - 1)                  # stride-1 "wide" output rows
    M = Ho1 * Wp                            # wide output length (padded width)

    # ---- tiling ---------------------------------------------------------
    max_off = d * (k - 1) * (Wp + 1)                  # largest static tap offset
    H_t = _round_up(max(max_off, 1), 128)             # halo block (lane aligned)
    M_t = _round_up(min(m_tile_target, _round_up(M, 128)), H_t)   # lane tile
    n_m = pl.cdiv(M, M_t)
    Mp = n_m * M_t
    Lp = (n_m + 1) * M_t                    # one extra zero tile => halo block in range
    step = M_t // H_t                       # halo-block index stride

    Cin_p = _round_up(Cin, 16)              # bf16 sublane-packing alignment
    acc_cap = max(16, min(64, (128 * 1024) // (M_t * 4) // 16 * 16))
    Cout_t = min(_round_up(Cout, 8), acc_cap)
    Cout_p = _round_up(Cout, Cout_t)
    n_co = Cout_p // Cout_t

    # ---- fold BN into conv: per-out-channel scale into W, keep shift ----
    scale = gamma * lax.rsqrt(running_var + eps)                      # (Cout,)
    shift = beta - running_mean * scale
    w = weight * scale[:, None, None, None]                           # f32
    w = jnp.pad(w, ((0, Cout_p - Cout), (0, Cin_p - Cin), (0, 0), (0, 0)))
    # im2col row order = (dy, dx, cin)  -> matches xcol staging in the kernel
    w2 = w.transpose(0, 2, 3, 1).reshape(Cout_p, kk * Cin_p).astype(jnp.bfloat16)
    shift_p = jnp.pad(shift, (0, Cout_p - Cout)).reshape(Cout_p, 1).astype(jnp.float32)

    # ---- pad + flatten input once, bf16 BEFORE padding (single bf16 pass) ----
    # TODO(synk): fully in-kernel padding (pl.ANY + manual DMA) would remove this pass.
    x_bf = x.astype(jnp.bfloat16)
    xp = jnp.pad(x_bf, ((0, 0), (0, Cin_p - Cin), (p, p), (p, p)))    # (N,Cin_p,Hp,Wp)
    x_flat = xp.reshape(N, Cin_p, Hp * Wp)
    x_flat = jnp.pad(x_flat, ((0, 0), (0, 0), (0, Lp - Hp * Wp)))     # (N,Cin_p,Lp)

    # ---- VMEM budget (v7x has 64 MiB physical; default scoped limit is 16-32) ----
    out_isz = jnp.dtype(out_dtype).itemsize
    vmem_need = (2 * ((Cin_p * M_t + Cin_p * H_t) * 2                 # x tiles (dbl buf)
                      + Cout_t * kk * Cin_p * 2 + Cout_t * 4          # w + shift
                      + Cout_t * M_t * out_isz)                       # out tile
                 + (Cin_p * (M_t + H_t) + kk * Cin_p * M_t) * 2       # scratch
                 + (2 << 20))                                         # slack
    vmem_limit = int(min(64 * 2**20, max(vmem_need, 16 * 2**20)))

    flops = 2 * N * n_co * n_m * Cout_t * (kk * Cin_p) * M_t
    bytes_accessed = (x_flat.size * 2 + w2.size * 2 + shift_p.size * 4
                      + N * Cout_p * Mp * out_isz)

    kernel = _make_kernel(k, d, Wp, kk, Cin_p, M_t, act)
    y = pl.pallas_call(
        kernel,
        out_shape=jax.ShapeDtypeStruct((N, Cout_p, Mp), out_dtype),
        grid_spec=pltpu.PrefetchScalarGridSpec(
            num_scalar_prefetch=0,
            grid=(N, n_co, n_m),
            in_specs=[
                # lane tile of the flattened image
                pl.BlockSpec((1, Cin_p, M_t), lambda n, c, m: (n, 0, m)),
                # right halo of the same operand (static in-kernel slicing only)
                pl.BlockSpec((1, Cin_p, H_t),
                             lambda n, c, m: (n, 0, (m + 1) * step)),
                pl.BlockSpec((Cout_t, kk * Cin_p), lambda n, c, m: (c, 0)),
                pl.BlockSpec((Cout_t, 1), lambda n, c, m: (c, 0)),
            ],
            out_specs=pl.BlockSpec((1, Cout_t, M_t), lambda n, c, m: (n, c, m)),
            scratch_shapes=[
                pltpu.VMEM((Cin_p, M_t + H_t), jnp.bfloat16),   # tile + halo window
                pltpu.VMEM((kk * Cin_p, M_t), jnp.bfloat16),    # staged im2col
            ],
        ),
        compiler_params=pltpu.CompilerParams(
            dimension_semantics=("parallel", "parallel", "parallel"),
            vmem_limit_bytes=vmem_limit),
        cost_estimate=pl.CostEstimate(flops=flops, transcendentals=0,
                                      bytes_accessed=bytes_accessed),
    )(x_flat, x_flat, w2, shift_p)

    # ---- select valid columns / apply stride (wide -> true conv output) ----
    # TODO(synk): for s > 1 the stride/valid-column selection could move in-kernel.
    y = y[:, :Cout, :M].reshape(N, Cout, Ho1, Wp)
    y = y[:, :, :(Ho - 1) * s + 1:s, :(Wo - 1) * s + 1:s]               # (N,Cout,Ho,Wo)
    return y


# --------------------------------------------------------------- reference ---
def _reference(x, weight, gamma, beta, mean, var, *, k, p, s, eps=1e-5):
    conv = lax.conv_general_dilated(
        x, weight, window_strides=(s, s), padding=[(p, p), (p, p)],
        dimension_numbers=("NCHW", "OIHW", "NCHW"))
    scale = (gamma / jnp.sqrt(var + eps)).reshape(1, -1, 1, 1)
    shift = (beta - mean * gamma / jnp.sqrt(var + eps)).reshape(1, -1, 1, 1)
    y = conv * scale + shift
    return jnp.where(y > 0, y, 0.1 * y)


# ------------------------------------------------------------------- main ----
if __name__ == "__main__":
    # module config: Conv(in_ch=4, out_ch=8, k=3, p=1, s=1, act=True, bias=False)
    in_ch, out_ch, k, p, s = 4, 8, 3, 1, 1
    N, H, W = 2, 16, 16

    key = jax.random.PRNGKey(0)
    kx, kw, kg, kb, km, kv = jax.random.split(key, 6)

    x = jax.random.normal(kx, (N, in_ch, H, W), dtype=jnp.float32)
    weight = jax.random.normal(kw, (out_ch, in_ch, k, k), dtype=jnp.float32) * 0.1
    gamma = 1.0 + 0.1 * jax.random.normal(kg, (out_ch,), dtype=jnp.float32)
    beta = 0.1 * jax.random.normal(kb, (out_ch,), dtype=jnp.float32)
    running_mean = 0.1 * jax.random.normal(km, (out_ch,), dtype=jnp.float32)
    running_var = 1.0 + 0.1 * jax.random.uniform(kv, (out_ch,), dtype=jnp.float32)

    out = conv_bn_lrelu(x, weight, gamma, beta, running_mean, running_var,
                        k=k, p=p, s=s)
    out = jax.block_until_ready(out)

    ref = _reference(x, weight, gamma, beta, running_mean, running_var,
                     k=k, p=p, s=s)
    assert out.shape == (N, out_ch, H, W), out.shape
    # bf16 matmul operands + bf16 store (f32 accumulation) -> loosened tolerance
    out_f32 = out.astype(jnp.float32)
    assert jnp.allclose(out_f32, ref, atol=5e-2, rtol=5e-2), \
        float(jnp.max(jnp.abs(out_f32 - ref)))

    print("KERNEL_OK")
</pallas_src>

<mosaic_0001>
module attributes {stable_mosaic.version = 11 : i64} {
  func.func @kernel(%arg0: i32, %arg1: i32, %arg2: i32, %arg3: memref<1x16x384xbf16, #tpu.memory_space<vmem>>, %arg4: memref<1x16x128xbf16, #tpu.memory_space<vmem>>, %arg5: memref<8x144xbf16, #tpu.memory_space<vmem>>, %arg6: memref<8x1xf32, #tpu.memory_space<vmem>>, %arg7: memref<1x8x384xbf16, #tpu.memory_space<vmem>>, %arg8: memref<16x512xbf16, #tpu.memory_space<vmem>>, %arg9: memref<144x384xbf16, #tpu.memory_space<vmem>>) attributes {dimension_semantics = [#tpu.dimension_semantics<parallel>, #tpu.dimension_semantics<parallel>, #tpu.dimension_semantics<parallel>], iteration_bounds = array<i64: 2, 1, 1>, scalar_prefetch = 0 : i64, scratch_operands = 2 : i64, tpu.core_type = #tpu.core_type<tc>, window_params = [{transform_indices = @transform_0, window_bounds = array<i64: 1, 16, 384>}, {transform_indices = @transform_1, window_bounds = array<i64: 1, 16, 128>}, {transform_indices = @transform_2, window_bounds = array<i64: 8, 144>}, {transform_indices = @transform_3, window_bounds = array<i64: 8, 1>}, {transform_indices = @transform_4, window_bounds = array<i64: 1, 8, 384>}]} {
    %c0 = arith.constant 0 : index
    %c0_0 = arith.constant 0 : index
    %c0_1 = arith.constant 0 : index
    %0 = vector.load %arg3[%c0, %c0_0, %c0_1] : memref<1x16x384xbf16, #tpu.memory_space<vmem>>, vector<1x16x384xbf16>
    %1 = vector.shape_cast %0 : vector<1x16x384xbf16> to vector<16x384xbf16>
    %c0_2 = arith.constant 0 : index
    %c0_3 = arith.constant 0 : index
    %2 = vector.load %arg8[%c0_2, %c0_3] : memref<16x512xbf16, #tpu.memory_space<vmem>>, vector<16x384xbf16>
    tpu.vector_store %arg8[%c0_2, %c0_3], %1 {strides = array<i32>} : memref<16x512xbf16, #tpu.memory_space<vmem>>, vector<16x384xbf16>,
    %c0_4 = arith.constant 0 : index
    %c0_5 = arith.constant 0 : index
    %c0_6 = arith.constant 0 : index
    %3 = vector.load %arg4[%c0_4, %c0_5, %c0_6] : memref<1x16x128xbf16, #tpu.memory_space<vmem>>, vector<1x16x128xbf16>
    %4 = vector.shape_cast %3 : vector<1x16x128xbf16> to vector<16x128xbf16>
    %c0_7 = arith.constant 0 : index
    %c384 = arith.constant 384 : index
    %5 = vector.load %arg8[%c0_7, %c384] : memref<16x512xbf16, #tpu.memory_space<vmem>>, vector<16x128xbf16>
    tpu.vector_store %arg8[%c0_7, %c384], %4 {strides = array<i32>} : memref<16x512xbf16, #tpu.memory_space<vmem>>, vector<16x128xbf16>,
    %c0_8 = arith.constant 0 : index
    %c0_9 = arith.constant 0 : index
    %6 = vector.load %arg8[%c0_8, %c0_9] : memref<16x512xbf16, #tpu.memory_space<vmem>>, vector<16x384xbf16>
    %c0_10 = arith.constant 0 : index
    %c0_11 = arith.constant 0 : index
    %7 = vector.load %arg9[%c0_10, %c0_11] : memref<144x384xbf16, #tpu.memory_space<vmem>>, vector<16x384xbf16>
    tpu.vector_store %arg9[%c0_10, %c0_11], %6 {strides = array<i32>} : memref<144x384xbf16, #tpu.memory_space<vmem>>, vector<16x384xbf16>,
    %c0_12 = arith.constant 0 : index
    %c1 = arith.constant 1 : index
    %8 = vector.load %arg8[%c0_12, %c1] : memref<16x512xbf16, #tpu.memory_space<vmem>>, vector<16x384xbf16>
    %c16 = arith.constant 16 : index
    %c0_13 = arith.constant 0 : index
    %9 = vector.load %arg9[%c16, %c0_13] : memref<144x384xbf16, #tpu.memory_space<vmem>>, vector<16x384xbf16>
    tpu.vector_store %arg9[%c16, %c0_13], %8 {strides = array<i32>} : memref<144x384xbf16, #tpu.memory_space<vmem>>, vector<16x384xbf16>,
    %c0_14 = arith.constant 0 : index
    %c2 = arith.constant 2 : index
    %10 = vector.load %arg8[%c0_14, %c2] : memref<16x512xbf16, #tpu.memory_space<vmem>>, vector<16x384xbf16>
    %c32 = arith.constant 32 : index
    %c0_15 = arith.constant 0 : index
    %11 = vector.load %arg9[%c32, %c0_15] : memref<144x384xbf16, #tpu.memory_space<vmem>>, vector<16x384xbf16>
    tpu.vector_store %arg9[%c32, %c0_15], %10 {strides = array<i32>} : memref<144x384xbf16, #tpu.memory_space<vmem>>, vector<16x384xbf16>,
    %c0_16 = arith.constant 0 : index
    %c18 = arith.constant 18 : index
    %12 = vector.load %arg8[%c0_16, %c18] : memref<16x512xbf16, #tpu.memory_space<vmem>>, vector<16x384xbf16>
    %c48 = arith.constant 48 : index
    %c0_17 = arith.constant 0 : index
    %13 = vector.load %arg9[%c48, %c0_17] : memref<144x384xbf16, #tpu.memory_space<vmem>>, vector<16x384xbf16>
    tpu.vector_store %arg9[%c48, %c0_17], %12 {strides = array<i32>} : memref<144x384xbf16, #tpu.memory_space<vmem>>, vector<16x384xbf16>,
    %c0_18 = arith.constant 0 : index
    %c19 = arith.constant 19 : index
    %14 = vector.load %arg8[%c0_18, %c19] : memref<16x512xbf16, #tpu.memory_space<vmem>>, vector<16x384xbf16>
    %c64 = arith.constant 64 : index
    %c0_19 = arith.constant 0 : index
    %15 = vector.load %arg9[%c64, %c0_19] : memref<144x384xbf16, #tpu.memory_space<vmem>>, vector<16x384xbf16>
    tpu.vector_store %arg9[%c64, %c0_19], %14 {strides = array<i32>} : memref<144x384xbf16, #tpu.memory_space<vmem>>, vector<16x384xbf16>,
    %c0_20 = arith.constant 0 : index
    %c20 = arith.constant 20 : index
    %16 = vector.load %arg8[%c0_20, %c20] : memref<16x512xbf16, #tpu.memory_space<vmem>>, vector<16x384xbf16>
    %c80 = arith.constant 80 : index
    %c0_21 = arith.constant 0 : index
    %17 = vector.load %arg9[%c80, %c0_21] : memref<144x384xbf16, #tpu.memory_space<vmem>>, vector<16x384xbf16>
    tpu.vector_store %arg9[%c80, %c0_21], %16 {strides = array<i32>} : memref<144x384xbf16, #tpu.memory_space<vmem>>, vector<16x384xbf16>,
    %c0_22 = arith.constant 0 : index
    %c36 = arith.constant 36 : index
    %18 = vector.load %arg8[%c0_22, %c36] : memref<16x512xbf16, #tpu.memory_space<vmem>>, vector<16x384xbf16>
    %c96 = arith.constant 96 : index
    %c0_23 = arith.constant 0 : index
    %19 = vector.load %arg9[%c96, %c0_23] : memref<144x384xbf16, #tpu.memory_space<vmem>>, vector<16x384xbf16>
    tpu.vector_store %arg9[%c96, %c0_23], %18 {strides = array<i32>} : memref<144x384xbf16, #tpu.memory_space<vmem>>, vector<16x384xbf16>,
    %c0_24 = arith.constant 0 : index
    %c37 = arith.constant 37 : index
    %20 = vector.load %arg8[%c0_24, %c37] : memref<16x512xbf16, #tpu.memory_space<vmem>>, vector<16x384xbf16>
    %c112 = arith.constant 112 : index
    %c0_25 = arith.constant 0 : index
    %21 = vector.load %arg9[%c112, %c0_25] : memref<144x384xbf16, #tpu.memory_space<vmem>>, vector<16x384xbf16>
    tpu.vector_store %arg9[%c112, %c0_25], %20 {strides = array<i32>} : memref<144x384xbf16, #tpu.memory_space<vmem>>, vector<16x384xbf16>,
    %c0_26 = arith.constant 0 : index
    %c38 = arith.constant 38 : index
    %22 = vector.load %arg8[%c0_26, %c38] : memref<16x512xbf16, #tpu.memory_space<vmem>>, vector<16x384xbf16>
    %c128 = arith.constant 128 : index
    %c0_27 = arith.constant 0 : index
    %23 = vector.load %arg9[%c128, %c0_27] : memref<144x384xbf16, #tpu.memory_space<vmem>>, vector<16x384xbf16>
    tpu.vector_store %arg9[%c128, %c0_27], %22 {strides = array<i32>} : memref<144x384xbf16, #tpu.memory_space<vmem>>, vector<16x384xbf16>,
    %c0_28 = arith.constant 0 : index
    %c0_29 = arith.constant 0 : index
    %24 = vector.load %arg5[%c0_28, %c0_29] : memref<8x144xbf16, #tpu.memory_space<vmem>>, vector<8x144xbf16>
    %c0_30 = arith.constant 0 : index
    %c0_31 = arith.constant 0 : index
    %25 = vector.load %arg9[%c0_30, %c0_31] : memref<144x384xbf16, #tpu.memory_space<vmem>>, vector<144x384xbf16>
    %cst = arith.constant dense<0.000000e+00> : vector<8x384xf32>
    %26 = tpu.matmul %24, %25, %cst {dimension_numbers = #tpu.dot_dimension_numbers<[1], [0], [0], [1], [0, 0, 1, 1], [], []>} : vector<8x144xbf16>, vector<144x384xbf16>, vector<8x384xf32> -> vector<8x384xf32>
    %c0_32 = arith.constant 0 : index
    %c0_33 = arith.constant 0 : index
    %27 = vector.load %arg6[%c0_32, %c0_33] : memref<8x1xf32, #tpu.memory_space<vmem>>, vector<8x1xf32>
    %28 = vector.broadcast %27 : vector<8x1xf32> to vector<8x384xf32>
    %29 = arith.addf %26, %28 : vector<8x384xf32>
    %cst_34 = arith.constant 0.000000e+00 : f32
    %30 = vector.broadcast %cst_34 : f32 to vector<8x384xf32>
    %31 = arith.cmpf ogt, %29, %30 : vector<8x384xf32>
    %cst_35 = arith.constant 1.000000e-01 : f32
    %32 = vector.broadcast %cst_35 : f32 to vector<8x384xf32>
    %33 = arith.mulf %32, %29 : vector<8x384xf32>
    %34 = arith.select %31, %29, %33 : vector<8x384xi1>, vector<8x384xf32>
    %35 = arith.truncf %34 : vector<8x384xf32> to vector<8x384xbf16>
    %c0_36 = arith.constant 0 : index
    %c0_37 = arith.constant 0 : index
    %c0_38 = arith.constant 0 : index
    %36 = vector.load %arg7[%c0_36, %c0_37, %c0_38] : memref<1x8x384xbf16, #tpu.memory_space<vmem>>, vector<1x8x384xbf16>
    %37 = vector.shape_cast %36 : vector<1x8x384xbf16> to vector<8x384xbf16>
    %38 = vector.shape_cast %35 : vector<8x384xbf16> to vector<1x8x384xbf16>
    tpu.vector_store %arg7[%c0_36, %c0_37, %c0_38], %38 {strides = array<i32>} : memref<1x8x384xbf16, #tpu.memory_space<vmem>>, vector<1x8x384xbf16>,
    return
  }
  func.func @transform_0(%arg0: i32, %arg1: i32, %arg2: i32) -> (i32, i32, i32) {
    %c0_i32 = arith.constant 0 : i32
    %c0_i32_0 = arith.constant 0 : i32
    return %arg0, %c0_i32, %arg2 : i32, i32, i32
  }
  func.func @transform_1(%arg0: i32, %arg1: i32, %arg2: i32) -> (i32, i32, i32) {
    %c1_i32 = arith.constant 1 : i32
    %0 = arith.addi %arg2, %c1_i32 : i32
    %c3_i32 = arith.constant 3 : i32
    %1 = arith.muli %0, %c3_i32 : i32
    %c0_i32 = arith.constant 0 : i32
    %c0_i32_0 = arith.constant 0 : i32
    return %arg0, %c0_i32, %1 : i32, i32, i32
  }
  func.func @transform_2(%arg0: i32, %arg1: i32, %arg2: i32) -> (i32, i32) {
    %c0_i32 = arith.constant 0 : i32
    %c0_i32_0 = arith.constant 0 : i32
    return %arg1, %c0_i32 : i32, i32
  }
  func.func @transform_3(%arg0: i32, %arg1: i32, %arg2: i32) -> (i32, i32) {
    %c0_i32 = arith.constant 0 : i32
    %c0_i32_0 = arith.constant 0 : i32
    return %arg1, %c0_i32 : i32, i32
  }
  func.func @transform_4(%arg0: i32, %arg1: i32, %arg2: i32) -> (i32, i32, i32) {
    %c0_i32 = arith.constant 0 : i32
    return %arg0, %arg1, %arg2 : i32, i32, i32
  }
}

</mosaic_0001>

<llo_original>
// kernel: conv_bn_lrelu.1
$region0: #{conv_bn_lrelu.1}
  #allocation0 [shape = 'u32[]', space=smem, size = 0x4, offset = 0x4, fixed_abs, tag = 'smem constant byte address 0x4 - core index']
  #allocation1 [shape = 'u32[72,128]{1,0:T(1,128)}', space=vmem, size = 0x9000, scoped, tag = 'internal scratch']
  #allocation2 [shape = 'bf16[16,512]{1,0:T(8,128)(2,1)}', space=vmem, size = 0x4000, scoped, tag = 'scratch operand']
  #allocation3 [shape = 'bf16[144,384]{1,0:T(8,128)(2,1)}', space=vmem, size = 0x1b000, scoped, tag = 'scratch operand']
  %s0 = inlined_call_operand.vmem [shape: bf16[2,16,768], index: 0, kind: input, shape index: {}, may-alias: {0,1}]
  %s1 = inlined_call_operand.vmem [shape: bf16[2,16,768], index: 1, kind: input, shape index: {}, may-alias: {0,1}]
  %s2 = inlined_call_operand.vmem [shape: bf16[8,144], index: 2, kind: input, shape index: {}]
  %s3 = inlined_call_operand.vmem [shape: f32[8,1], index: 3, kind: input, shape index: {}]
  %s4 = inlined_call_operand.vmem [shape: bf16[2,8,384], index: 4, kind: output, shape index: {}]
  %s5 = sld [smem:[#allocation0]]
  $region116: #{conv_bn_lrelu.1} parent=0
    _
  %s7 = ssub.s32 1, %s5
  %s8 = scalar_select 0, %s7, %s5
  $region1: #{conv_bn_lrelu.1} parent=0
    #allocation4 [shape = 'u8[24576]{0}', space=vmem, size = 0x6000, scoped, tag = 'input window, operand 0']
    #allocation5 [shape = 'u8[8192]{0}', space=vmem, size = 0x2000, scoped, tag = 'input window, operand 1']
    loop: start=0, step=1, limit=4
    $region2: #{conv_bn_lrelu.1} parent=1 // loop_pre_header
      _
    $region3: #{conv_bn_lrelu.1} parent=1 // loop_header
      %s10 = sphi 0, %s14
      %p11 = scmp.ge.s32.totalorder %s10, 4
      %s17 = sphi 0, %s36
      %s18 = sphi 0, %s32
      %s19 = sphi 0, %s28
      %s20 = sphi 0, %s17
      %s21 = sphi 0, %s18
      %s22 = sphi 0, %s19
      %s23 = sphi 0, %s20
      %s24 = sphi 0, %s21
      %s25 = sphi 0, %s22
      %s41 = sphi 0, %s43
      %s44 = sphi 0, %s41
      %s45 = sphi 0, %s44
      %s61 = sphi 0, %s45
      %s73 = sphi 0, %s75
      %s76 = sphi 0, %s73
      %s77 = sphi 0, %s76
      %s93 = sphi 0, %s77
      %s99 = sphi 0, %s101
      %s102 = sphi 0, %s99
      %s103 = sphi 0, %s102
      %s119 = sphi 0, %s103
      %s125 = sphi 0, %s127
      %s128 = sphi 0, %s125
      %s129 = sphi 0, %s128
      %s145 = sphi 0, %s129
      %s155 = sphi 0, %s157
      %s158 = sphi 0, %s155
      %s159 = sphi 0, %s158
      %s175 = sphi 0, %s159
    $region4: #{conv_bn_lrelu.1} parent=1 // loop_header_branch
      %13 = sbr.rel (%p11) target = $region8
    $region5: #{conv_bn_lrelu.1} parent=1 // loop_body
      %s15 = ssub.s32 %s10, 1
      %s16 = ssub.s32 %s10, 2
      %s26 = sadd.s32 1, %s19
      %p27 = scmp.ge.s32.totalorder %s26, 1
      %s28 = scalar_select %p27, 0, %s26
      %s29 = sadd.s32 1, %s18
      %s30 = scalar_select %p27, %s29, %s18
      %p31 = scmp.ge.s32.totalorder %s30, 1
      %s32 = scalar_select %p31, 0, %s30
      %s33 = sadd.s32 1, %s17
      %s34 = scalar_select %p31, %s33, %s17
      %p35 = scmp.ge.s32.totalorder %s34, 2
      %s36 = scalar_select %p35, 0, %s34
      %s37 = ssub.s32 %s17, %s36
      %s38 = ssub.s32 %s19, %s28
      %s39 = sor.u32 %s37, %s38
      %p40 = scmp.eq.s32.totalorder %s39, 0
      %s42 = sadd.s32 %s41, 1
      %s43 = scalar_select %p40, %s41, %s42
      %p46 = pneg %p40
      %p47 = scmp.eq.s32.totalorder %s10, 1
      %p48 = por %p46, %p47
      %p49 = scmp.ne.s32.totalorder %s41, %s44
      %p50 = scmp.eq.s32.totalorder %s10, 0
      %p51 = por %p49, %p50
      %p52 = scmp.ne.s32.totalorder %s41, %s44
      %p53 = scmp.eq.s32.totalorder %s15, 1
      %p54 = por %p52, %p53
      %p55 = scmp.ne.s32.totalorder %s44, %s45
      %p56 = scmp.eq.s32.totalorder %s15, 0
      %p57 = por %p55, %p56
      %p58 = scmp.ne.s32.totalorder %s44, %s45
      %p59 = scmp.eq.s32.totalorder %s16, 1
      %p60 = por %p58, %p59
      %p62 = scmp.ne.s32.totalorder %s45, %s61
      %p63 = scmp.eq.s32.totalorder %s16, 0
      %p64 = por %p62, %p63
      %s65 = sadd.s32 %s19, 1
      %s66 = smul.u32 %s65, 3
      %s67 = sadd.s32 %s28, 1
      %s68 = smul.u32 %s67, 3
      %s69 = ssub.s32 %s17, %s36
      %s70 = ssub.s32 %s66, %s68
      %s71 = sor.u32 %s69, %s70
      %p72 = scmp.eq.s32.totalorder %s71, 0
      %s74 = sadd.s32 %s73, 1
      %s75 = scalar_select %p72, %s73, %s74
      %p78 = pneg %p72
      %p79 = scmp.eq.s32.totalorder %s10, 1
      %p80 = por %p78, %p79
      %p81 = scmp.ne.s32.totalorder %s73, %s76
      %p82 = scmp.eq.s32.totalorder %s10, 0
      %p83 = por %p81, %p82
      %p84 = scmp.ne.s32.totalorder %s73, %s76
      %p85 = scmp.eq.s32.totalorder %s15, 1
      %p86 = por %p84, %p85
      %p87 = scmp.ne.s32.totalorder %s76, %s77
      %p88 = scmp.eq.s32.totalorder %s15, 0
      %p89 = por %p87, %p88
      %p90 = scmp.ne.s32.totalorder %s76, %s77
      %p91 = scmp.eq.s32.totalorder %s16, 1
      %p92 = por %p90, %p91
      %p94 = scmp.ne.s32.totalorder %s77, %s93
      %p95 = scmp.eq.s32.totalorder %s16, 0
      %p96 = por %p94, %p95
      %s97 = ssub.s32 %s18, %s32
      %p98 = scmp.eq.s32.totalorder %s97, 0
      %s100 = sadd.s32 %s99, 1
      %s101 = scalar_select %p98, %s99, %s100
      %p104 = pneg %p98
      %p105 = scmp.eq.s32.totalorder %s10, 1
      %p106 = por %p104, %p105
      %p107 = scmp.ne.s32.totalorder %s99, %s102
      %p108 = scmp.eq.s32.totalorder %s10, 0
      %p109 = por %p107, %p108
      %p110 = scmp.ne.s32.totalorder %s99, %s102
      %p111 = scmp.eq.s32.totalorder %s15, 1
      %p112 = por %p110, %p111
      %p113 = scmp.ne.s32.totalorder %s102, %s103
      %p114 = scmp.eq.s32.totalorder %s15, 0
      %p115 = por %p113, %p114
      %p116 = scmp.ne.s32.totalorder %s102, %s103
      %p117 = scmp.eq.s32.totalorder %s16, 1
      %p118 = por %p116, %p117
      %p120 = scmp.ne.s32.totalorder %s103, %s119
      %p121 = scmp.eq.s32.totalorder %s16, 0
      %p122 = por %p120, %p121
      %s123 = ssub.s32 %s18, %s32
      %p124 = scmp.eq.s32.totalorder %s123, 0
      %s126 = sadd.s32 %s125, 1
      %s127 = scalar_select %p124, %s125, %s126
      %p130 = pneg %p124
      %p131 = scmp.eq.s32.totalorder %s10, 1
      %p132 = por %p130, %p131
      %p133 = scmp.ne.s32.totalorder %s125, %s128
      %p134 = scmp.eq.s32.totalorder %s10, 0
      %p135 = por %p133, %p134
      %p136 = scmp.ne.s32.totalorder %s125, %s128
      %p137 = scmp.eq.s32.totalorder %s15, 1
      %p138 = por %p136, %p137
      %p139 = scmp.ne.s32.totalorder %s128, %s129
      %p140 = scmp.eq.s32.totalorder %s15, 0
      %p141 = por %p139, %p140
      %p142 = scmp.ne.s32.totalorder %s128, %s129
      %p143 = scmp.eq.s32.totalorder %s16, 1
      %p144 = por %p142, %p143
      %p146 = scmp.ne.s32.totalorder %s129, %s145
      %p147 = scmp.eq.s32.totalorder %s16, 0
      %p148 = por %p146, %p147
      %s149 = ssub.s32 %s17, %s36
      %s150 = ssub.s32 %s18, %s32
      %s151 = sor.u32 %s149, %s150
      %s152 = ssub.s32 %s19, %s28
      %s153 = sor.u32 %s151, %s152
      %p154 = scmp.eq.s32.totalorder %s153, 0
      %s156 = sadd.s32 %s155, 1
      %s157 = scalar_select %p154, %s155, %s156
      %p160 = pneg %p154
      %p161 = scmp.eq.s32.totalorder %s10, 1
      %p162 = por %p160, %p161
      %p163 = scmp.ne.s32.totalorder %s155, %s158
      %p164 = scmp.eq.s32.totalorder %s10, 0
      %p165 = por %p163, %p164
      %p166 = scmp.ne.s32.totalorder %s155, %s158
      %p167 = scmp.eq.s32.totalorder %s15, 1
      %p168 = por %p166, %p167
      %p169 = scmp.ne.s32.totalorder %s158, %s159
      %p170 = scmp.eq.s32.totalorder %s15, 0
      %p171 = por %p169, %p170
      %p172 = scmp.ne.s32.totalorder %s158, %s159
      %p173 = scmp.eq.s32.totalorder %s16, 1
      %p174 = por %p172, %p173
      %p176 = scmp.ne.s32.totalorder %s159, %s175
      %p177 = scmp.eq.s32.totalorder %s16, 0
      %p178 = por %p176, %p177
      %p179 = scmp.le.s32.totalorder 1, %s10
      %p180 = scmp.lt.s32.totalorder %s10, 3
      %p181 = pnand %p179, %p180
      %p182 = pneg %p181
      // Predicated region
      $region9: #{conv_bn_lrelu.1} parent=5 // pred_check
        _
      $region10: #{conv_bn_lrelu.1} parent=5 // pred_check_branch
        %184 = sbr.rel (%p181) target = $region12
      $region11: #{conv_bn_lrelu.1} parent=5 // pred_region
        %s185 = ssub.s32 %s10, 1
        // Predicated region
        $region13: #{conv_bn_lrelu.1} parent=11 // pred_check
          %p186 = pneg %p115
        $region14: #{conv_bn_lrelu.1} parent=11 // pred_check_branch
          %188 = sbr.rel (%p186) target = $region16
        $region15: #{conv_bn_lrelu.1} parent=11 // pred_region
          %p189 = scmp.lt.s32.totalorder %s21, 0
          %s190 = scalar_select %p189, %s21, 0
          %s191 = smul.addr %s190, 2
          %s192 = smul.addr %s191, 4
          %s193 = scalar_lea.vmem %s2, %s192
        $region16: #{conv_bn_lrelu.1} parent=11 // pred_fallthru
          _
        // Predicated region
        $region17: #{conv_bn_lrelu.1} parent=11 // pred_check
          %p194 = pneg %p141
        $region18: #{conv_bn_lrelu.1} parent=11 // pred_check_branch
          %196 = sbr.rel (%p194) target = $region20
        $region19: #{conv_bn_lrelu.1} parent=11 // pred_region
          %p197 = scmp.lt.s32.totalorder %s21, 0
          %s198 = scalar_select %p197, %s21, 0
          %s199 = smul.addr %s198, 8
          %s200 = scalar_lea.vmem %s3, %s199
        $region20: #{conv_bn_lrelu.1} parent=11 // pred_fallthru
          _
      $region12: #{conv_bn_lrelu.1} parent=5 // pred_fallthru
        _
      %p201 = scmp.lt.s32.totalorder %s10, 2
      // Predicated region
      $region21: #{conv_bn_lrelu.1} parent=5 // pred_check
        %p202 = pneg %p201
      $region22: #{conv_bn_lrelu.1} parent=5 // pred_check_branch
        %204 = sbr.rel (%p202) target = $region24
      $region23: #{conv_bn_lrelu.1} parent=5 // pred_region
        // Predicated region
        $region25: #{conv_bn_lrelu.1} parent=23 // pred_check
          %p205 = pneg %p51
        $region26: #{conv_bn_lrelu.1} parent=23 // pred_check_branch
          %207 = sbr.rel (%p205) target = $region28
        $region27: #{conv_bn_lrelu.1} parent=23 // pred_region
          %s208 = sand.u32 %s41, 1
          %s209 = sand.u32 %s41, 1
          %s210 = smul.addr %s209, 24
          %s211 = scalar_lea.vmem [#allocation4], %s210
          %s212 = smul.u32 3, %s19
          %s213 = smul.addr %s17, 12
          %s214 = sadd.s32 %s212, %s213
          %s215 = smul.addr %s214, 4
          %s216 = scalar_lea.vmem %s0, %s215
          // Predicated region
          $region29: #{conv_bn_lrelu.1} parent=27 // pred_check
            _
          $region30: #{conv_bn_lrelu.1} parent=27 // pred_check_branch
            %218 = sbr.rel (0) target = $region32
          $region31: #{conv_bn_lrelu.1} parent=27 // pred_region
            // Predicated region
            $region33: #{conv_bn_lrelu.1} parent=31 // pred_check
              _
            $region34: #{conv_bn_lrelu.1} parent=31 // pred_check_branch
              %220 = sbr.rel (0) target = $region36
            $region35: #{conv_bn_lrelu.1} parent=31 // pred_region
              %s221 = scalar_lea.vmem %s216, 8
              %s222 = scalar_lea.vmem %s211, 8 [#allocation4]
              loop: start=0, step=1, limit=1
              $region37: #{conv_bn_lrelu.1} parent=35 // loop_pre_header
                _
              $region38: #{conv_bn_lrelu.1} parent=35 // loop_header
                %s224 = sphi 0, %s228
                %p225 = scmp.ge.s32.totalorder %s224, 1
                %s229 = sphi %s216, %s216
                %s230 = sphi %s211, %s211
              $region39: #{conv_bn_lrelu.1} parent=35 // loop_header_branch
                %227 = sbr.rel (%p225) target = $region43
              $region40: #{conv_bn_lrelu.1} parent=35 // loop_body
                %v231 = vld [vmem:[%s229] sm:$0xff]
                %232 = vst [vmem:[%s230] sm:$0xff] %v231
                %v233 = vld [vmem:[%s229 + $0x18] sm:$0xff]
                %234 = vst [vmem:[%s230 + $0xc] sm:$0xff] %v233
              $region41: #{conv_bn_lrelu.1} parent=35 // loop_footer
                %s228 = sadd.s32 1, %s224
              $region42: #{conv_bn_lrelu.1} parent=35 // loop_footer_branch
                %223 = sbr.rel target = $region38
              $region43: #{conv_bn_lrelu.1} parent=35 // loop_exit
                _
              %s236 = ssub.s32 16, 1
              loop: start=0, step=1, limit=1
              $region44: #{conv_bn_lrelu.1} parent=35 // loop_pre_header
                _
              $region45: #{conv_bn_lrelu.1} parent=35 // loop_header
                %s238 = sphi 0, %s242
                %p239 = scmp.ge.s32.totalorder %s238, 1
                %s243 = sphi %s221, %s221
                %s244 = sphi %s222, %s222
              $region46: #{conv_bn_lrelu.1} parent=35 // loop_header_branch
                %241 = sbr.rel (%p239) target = $region50
              $region47: #{conv_bn_lrelu.1} parent=35 // loop_body
                %v245 = vld [vmem:[%s243] sm:%s236]
                %246 = vst [vmem:[%s244] sm:%s236] %v245
                %v247 = vld [vmem:[%s243 + $0x18] sm:%s236]
                %248 = vst [vmem:[%s244 + $0xc] sm:%s236] %v247
              $region48: #{conv_bn_lrelu.1} parent=35 // loop_footer
                %s242 = sadd.s32 1, %s238
              $region49: #{conv_bn_lrelu.1} parent=35 // loop_footer_branch
                %237 = sbr.rel target = $region45
              $region50: #{conv_bn_lrelu.1} parent=35 // loop_exit
                _
            $region36: #{conv_bn_lrelu.1} parent=31 // pred_fallthru
              _
          $region32: #{conv_bn_lrelu.1} parent=27 // pred_fallthru
            _
          %249 = vnop
        $region28: #{conv_bn_lrelu.1} parent=23 // pred_fallthru
          _
        // Predicated region
        $region51: #{conv_bn_lrelu.1} parent=23 // pred_check
          %p250 = pneg %p83
        $region52: #{conv_bn_lrelu.1} parent=23 // pred_check_branch
          %252 = sbr.rel (%p250) target = $region54
        $region53: #{conv_bn_lrelu.1} parent=23 // pred_region
          %s253 = sand.u32 %s73, 1
          %s254 = sand.u32 %s73, 1
          %s255 = smul.addr %s254, 8
          %s256 = scalar_lea.vmem [#allocation5], %s255
          %s257 = sadd.s32 %s19, 1
          %s258 = smul.u32 %s257, 3
          %s259 = smul.addr %s17, 12
          %s260 = sadd.s32 %s258, %s259
          %s261 = smul.addr %s260, 4
          %s262 = scalar_lea.vmem %s1, %s261
          // Predicated region
          $region55: #{conv_bn_lrelu.1} parent=53 // pred_check
            _
          $region56: #{conv_bn_lrelu.1} parent=53 // pred_check_branch
            %264 = sbr.rel (0) target = $region58
          $region57: #{conv_bn_lrelu.1} parent=53 // pred_region
            // Predicated region
            $region59: #{conv_bn_lrelu.1} parent=57 // pred_check
              _
            $region60: #{conv_bn_lrelu.1} parent=57 // pred_check_branch
              %266 = sbr.rel target = $region62
            $region61: #{conv_bn_lrelu.1} parent=57 // pred_region
              // Predicated region
              $region74: #{conv_bn_lrelu.1} parent=61 // pred_check
                _
              $region75: #{conv_bn_lrelu.1} parent=61 // pred_check_branch
                %284 = sbr.rel (0) target = $region77
              $region76: #{conv_bn_lrelu.1} parent=61 // pred_region
                loop: start=0, step=1, limit=1
                $region78: #{conv_bn_lrelu.1} parent=76 // loop_pre_header
                  _
                $region79: #{conv_bn_lrelu.1} parent=76 // loop_header
                  %s286 = sphi 0, %s290
                  %p287 = scmp.ge.s32.totalorder %s286, 1
                  %s291 = sphi %s262, %s262
                  %s292 = sphi %s256, %s256
                $region80: #{conv_bn_lrelu.1} parent=76 // loop_header_branch
                  %289 = sbr.rel (%p287) target = $region84
                $region81: #{conv_bn_lrelu.1} parent=76 // loop_body
                  _
                $region82: #{conv_bn_lrelu.1} parent=76 // loop_footer
                  %s290 = sadd.s32 1, %s286
                $region83: #{conv_bn_lrelu.1} parent=76 // loop_footer_branch
                  %285 = sbr.rel target = $region79
                $region84: #{conv_bn_lrelu.1} parent=76 // loop_exit
                  _
                %s294 = ssub.s32 16, 1
                loop: start=0, step=1, limit=1
                $region85: #{conv_bn_lrelu.1} parent=76 // loop_pre_header
                  _
                $region86: #{conv_bn_lrelu.1} parent=76 // loop_header
                  %s296 = sphi 0, %s300
                  %p297 = scmp.ge.s32.totalorder %s296, 1
                  %s301 = sphi %s262, %s262
                  %s302 = sphi %s256, %s256
                $region87: #{conv_bn_lrelu.1} parent=76 // loop_header_branch
                  %299 = sbr.rel (%p297) target = $region91
                $region88: #{conv_bn_lrelu.1} parent=76 // loop_body
                  %v303 = vld [vmem:[%s301] sm:%s294]
                  %304 = vst [vmem:[%s302] sm:%s294] %v303
                  %v305 = vld [vmem:[%s301 + $0x18] sm:%s294]
                  %306 = vst [vmem:[%s302 + $0x4] sm:%s294] %v305
                $region89: #{conv_bn_lrelu.1} parent=76 // loop_footer
                  %s300 = sadd.s32 1, %s296
                $region90: #{conv_bn_lrelu.1} parent=76 // loop_footer_branch
                  %295 = sbr.rel target = $region86
                $region91: #{conv_bn_lrelu.1} parent=76 // loop_exit
                  _
              $region77: #{conv_bn_lrelu.1} parent=61 // pred_fallthru
                _
            $region62: #{conv_bn_lrelu.1} parent=57 // pred_fallthru
              _
            // Predicated region
            $region63: #{conv_bn_lrelu.1} parent=57 // pred_check
              _
            $region64: #{conv_bn_lrelu.1} parent=57 // pred_check_branch
              %268 = sbr.rel (0) target = $region66
            $region65: #{conv_bn_lrelu.1} parent=57 // pred_region
              %s270 = ssub.s32 16, 1
              loop: start=0, step=1, limit=1
              $region67: #{conv_bn_lrelu.1} parent=65 // loop_pre_header
                _
              $region68: #{conv_bn_lrelu.1} parent=65 // loop_header
                %s272 = sphi 0, %s276
                %p273 = scmp.ge.s32.totalorder %s272, 1
                %s277 = sphi %s262, %s262
                %s278 = sphi %s256, %s256
              $region69: #{conv_bn_lrelu.1} parent=65 // loop_header_branch
                %275 = sbr.rel (%p273) target = $region73
              $region70: #{conv_bn_lrelu.1} parent=65 // loop_body
                %v279 = vld [vmem:[%s277] sm:%s270]
                %280 = vst [vmem:[%s278] sm:%s270] %v279
                %v281 = vld [vmem:[%s277 + $0x18] sm:%s270]
                %282 = vst [vmem:[%s278 + $0x4] sm:%s270] %v281
              $region71: #{conv_bn_lrelu.1} parent=65 // loop_footer
                %s276 = sadd.s32 1, %s272
              $region72: #{conv_bn_lrelu.1} parent=65 // loop_footer_branch
                %271 = sbr.rel target = $region68
              $region73: #{conv_bn_lrelu.1} parent=65 // loop_exit
                _
            $region66: #{conv_bn_lrelu.1} parent=57 // pred_fallthru
              _
          $region58: #{conv_bn_lrelu.1} parent=53 // pred_fallthru
            _
          %307 = vnop
        $region54: #{conv_bn_lrelu.1} parent=23 // pred_fallthru
          _
      $region24: #{conv_bn_lrelu.1} parent=5 // pred_fallthru
        _
      %p308 = scmp.le.s32.totalorder 1, %s10
      %p309 = scmp.lt.s32.totalorder %s10, 3
      %p310 = pnand %p308, %p309
      %p311 = pneg %p310
      // Predicated region
      $region92: #{conv_bn_lrelu.1} parent=5 // pred_check
        _
      $region93: #{conv_bn_lrelu.1} parent=5 // pred_check_branch
        %313 = sbr.rel (%p310) target = $region95
      $region94: #{conv_bn_lrelu.1} parent=5 // pred_region
        %s314 = ssub.s32 %s10, 1
        %s315 = sand.u32 %s44, 1
        %s316 = sand.u32 %s44, 1
        %s317 = smul.addr %s316, 24
        %s318 = scalar_lea.vmem [#allocation4], %s317
        // Predicated region
        $region96: #{conv_bn_lrelu.1} parent=94 // pred_check
          %p319 = pneg %p57
        $region97: #{conv_bn_lrelu.1} parent=94 // pred_check_branch
          %321 = sbr.rel (%p319) target = $region99
        $region98: #{conv_bn_lrelu.1} parent=94 // pred_region
          _
        $region99: #{conv_bn_lrelu.1} parent=94 // pred_fallthru
          _
        %s322 = sand.u32 %s76, 1
        %s323 = sand.u32 %s76, 1
        %s324 = smul.addr %s323, 8
        %s325 = scalar_lea.vmem [#allocation5], %s324
        // Predicated region
        $region100: #{conv_bn_lrelu.1} parent=94 // pred_check
          %p326 = pneg %p89
        $region101: #{conv_bn_lrelu.1} parent=94 // pred_check_branch
          %328 = sbr.rel (%p326) target = $region103
        $region102: #{conv_bn_lrelu.1} parent=94 // pred_region
          _
        $region103: #{conv_bn_lrelu.1} parent=94 // pred_fallthru
          _
        %s329 = sand.u32 %s44, 1
        %s330 = sand.u32 %s44, 1
        %s331 = smul.addr %s330, 24
        %s332 = scalar_lea.vmem [#allocation4], %s331
        %p333 = pneg %p57
        %p334 = pneg %p54
        %s335 = sand.u32 %s76, 1
        %s336 = sand.u32 %s76, 1
        %s337 = smul.addr %s336, 8
        %s338 = scalar_lea.vmem [#allocation5], %s337
        %p339 = pneg %p89
        %p340 = pneg %p86
        %p341 = scmp.lt.s32.totalorder %s21, 0
        %s342 = scalar_select %p341, %s21, 0
        %s343 = smul.addr %s342, 2
        %s344 = smul.addr %s343, 4
        %s345 = scalar_lea.vmem %s2, %s344
        %p346 = pneg %p115
        %p347 = pneg %p112
        %p348 = scmp.lt.s32.totalorder %s21, 0
        %s349 = scalar_select %p348, %s21, 0
        %s350 = smul.addr %s349, 8
        %s351 = scalar_lea.vmem %s3, %s350
        %p352 = pneg %p141
        %p353 = pneg %p138
        %p354 = pneg %p171
        %p355 = pneg %p168
        %s356 = smul.u32 3, %s22
        %p357 = scmp.lt.s32.totalorder %s20, 1
        %s358 = scalar_select %p357, %s20, 1
        %p359 = scmp.lt.s32.totalorder %s21, 0
        %s360 = scalar_select %p359, %s21, 0
        %p361 = scmp.lt.s32.totalorder %s356, 2
        %s362 = scalar_select %p361, %s356, 2
        %s363 = smul.addr %s360, 3
        %s364 = sadd.s32 %s362, %s363
        %s365 = smul.addr %s358, 3
        %s366 = sadd.s32 %s364, %s365
        %s367 = smul.addr %s366, 4
        %s368 = scalar_lea.vmem %s4, %s367
        %s369 = smul.u32 3, %s22
        %s370 = sadd.s32 %s22, 1
        %s371 = smul.u32 %s370, 3
        %p372 = scmp.lt.s32.totalorder %s21, 0
        %s373 = scalar_select %p372, %s21, 0
        %s374 = smul.addr %s373, 2
        %s375 = smul.addr %s374, 4
        %s376 = scalar_lea.vmem %s2, %s375
        %p377 = scmp.lt.s32.totalorder %s21, 0
        %s378 = scalar_select %p377, %s21, 0
        %s379 = smul.addr %s378, 8
        %s380 = scalar_lea.vmem %s3, %s379
        %s381 = smul.u32 3, %s22
        %p382 = scmp.lt.s32.totalorder %s20, 1
        %s383 = scalar_select %p382, %s20, 1
        %p384 = scmp.lt.s32.totalorder %s21, 0
        %s385 = scalar_select %p384, %s21, 0
        %p386 = scmp.lt.s32.totalorder %s381, 2
        %s387 = scalar_select %p386, %s381, 2
        %s388 = smul.addr %s385, 3
        %s389 = sadd.s32 %s387, %s388
        %s390 = smul.addr %s383, 3
        %s391 = sadd.s32 %s389, %s390
        %s392 = smul.addr %s391, 4
        %s393 = scalar_lea.vmem %s4, %s392
        %s394 = smul.u32 3, %s22
        %v396 = vld [vmem:[%s318] sm:$0xff]
        %v397 = vld [vmem:[%s318 + $0x8] sm:$0xf]
        %v398 = vld [vmem:[%s318 + $0xc] sm:$0xff]
        %v399 = vld [vmem:[%s318 + $0x14] sm:$0xf]
        %400 = vst [vmem:[#allocation2] sm:$0xff] %v396
        %401 = vst [vmem:[#allocation2 + $0x8] sm:$0xf] %v397
        %402 = vst [vmem:[#allocation2 + $0x10] sm:$0xff] %v398
        %403 = vst [vmem:[#allocation2 + $0x18] sm:$0xf] %v399
        %v404 = vld [vmem:[%s325] sm:$0xf]
        %v405 = vld [vmem:[%s325 + $0x4] sm:$0xf]
        %406 = vst [vmem:[#allocation2 + $0xc] sm:$0xf] %v404
        %407 = vst [vmem:[#allocation2 + $0x1c] sm:$0xf] %v405
        %v408 = vld [vmem:[#allocation2] sm:$0xff]
        %v409 = vld [vmem:[#allocation2 + $0x8] sm:$0xf]
        %v410 = vld [vmem:[#allocation2 + $0x10] sm:$0xff]
        %v411 = vld [vmem:[#allocation2 + $0x18] sm:$0xf]
        %412 = vst [vmem:[#allocation3] sm:$0xff] %v408
        %413 = vst [vmem:[#allocation3 + $0x8] sm:$0xf] %v409
        %414 = vst [vmem:[#allocation3 + $0xc] sm:$0xff] %v410
        %415 = vst [vmem:[#allocation3 + $0x14] sm:$0xf] %v411
        %v416 = vld [vmem:[#allocation2] sm:$0xff]
        %v417 = vld [vmem:[#allocation2 + $0x8] sm:$0xff]
        %v418 = vld [vmem:[#allocation2 + $0x10] sm:$0xff]
        %v419 = vld [vmem:[#allocation2 + $0x18] sm:$0xff]
        %424 = vrot.lane.b32.xlu0 %v416, 127
        %v425 = vpop.permute.xlu0 %424
        %426 = vrot.lane.b32.xlu0 %v417, 127
        %v427 = vpop.permute.xlu0 %426
        %428 = vrot.lane.b32.xlu0 %v418, 127
        %v429 = vpop.permute.xlu0 %428
        %430 = vrot.lane.b32.xlu0 %v419, 127
        %v431 = vpop.permute.xlu0 %430
        %v432 = vrot.slane %v425, 4
        %v433 = vrot.slane %v427, 4
        %v434 = vrot.slane %v429, 4
        %v435 = vrot.slane %v431, 4
        %vm436 = vcmask 1043456
        %v437 = vsel %vm436, %v432, %v433
        %vm438 = vcmask 1039360
        %v439 = vsel %vm438, %v425, %v437
        %v440 = vsel %vm438, %v427, %v433
        %v441 = vsel %vm436, %v434, %v435
        %v442 = vsel %vm438, %v429, %v441
        %v443 = vsel %vm438, %v431, %v435
        %448 = vst [vmem:[#allocation3 + $0x18] sm:$0xff] %v439
        %449 = vst [vmem:[#allocation3 + $0x20] sm:$0xf] %v440
        %450 = vst [vmem:[#allocation3 + $0x24] sm:$0xff] %v442
        %451 = vst [vmem:[#allocation3 + $0x2c] sm:$0xf] %v443
        %v452 = vld [vmem:[#allocation2] sm:$0xff]
        %v453 = vld [vmem:[#allocation2 + $0x8] sm:$0xff]
        %v454 = vld [vmem:[#allocation2 + $0x10] sm:$0xff]
        %v455 = vld [vmem:[#allocation2 + $0x18] sm:$0xff]
        %460 = vrot.lane.b32.xlu0 %v452, 126
        %v461 = vpop.permute.xlu0 %460
        %462 = vrot.lane.b32.xlu0 %v453, 126
        %v463 = vpop.permute.xlu0 %462
        %464 = vrot.lane.b32.xlu0 %v454, 126
        %v465 = vpop.permute.xlu0 %464
        %466 = vrot.lane.b32.xlu0 %v455, 126
        %v467 = vpop.permute.xlu0 %466
        %v468 = vrot.slane %v461, 4
        %v469 = vrot.slane %v463, 4
        %v470 = vrot.slane %v465, 4
        %v471 = vrot.slane %v467, 4
        %v472 = vsel %vm436, %v468, %v469
        %vm473 = vcmask 1031168
        %v474 = vsel %vm473, %v461, %v472
        %v475 = vsel %vm473, %v463, %v469
        %v476 = vsel %vm436, %v470, %v471
        %v477 = vsel %vm473, %v465, %v476
        %v478 = vsel %vm473, %v467, %v471
        %483 = vst [vmem:[#allocation3 + $0x30] sm:$0xff] %v474
        %484 = vst [vmem:[#allocation3 + $0x38] sm:$0xf] %v475
        %485 = vst [vmem:[#allocation3 + $0x3c] sm:$0xff] %v477
        %486 = vst [vmem:[#allocation3 + $0x44] sm:$0xf] %v478
        %v487 = vld [vmem:[#allocation2] sm:$0xff]
        %v488 = vld [vmem:[#allocation2 + $0x8] sm:$0xff]
        %v489 = vld [vmem:[#allocation2 + $0x10] sm:$0xff]
        %v490 = vld [vmem:[#allocation2 + $0x18] sm:$0xff]
        %495 = vrot.lane.b32.xlu0 %v487, 110
        %v496 = vpop.permute.xlu0 %495
        %497 = vrot.lane.b32.xlu0 %v488, 110
        %v498 = vpop.permute.xlu0 %497
        %499 = vrot.lane.b32.xlu0 %v489, 110
        %v500 = vpop.permute.xlu0 %499
        %501 = vrot.lane.b32.xlu0 %v490, 110
        %v502 = vpop.permute.xlu0 %501
        %v503 = vrot.slane %v496, 4
        %v504 = vrot.slane %v498, 4
        %v505 = vrot.slane %v500, 4
        %v506 = vrot.slane %v502, 4
        %v507 = vsel %vm436, %v503, %v504
        %vm508 = vcmask 900096
        %v509 = vsel %vm508, %v496, %v507
        %v510 = vsel %vm508, %v498, %v504
        %v511 = vsel %vm436, %v505, %v506
        %v512 = vsel %vm508, %v500, %v511
        %v513 = vsel %vm508, %v502, %v506
        %518 = vst [vmem:[#allocation3 + $0x48] sm:$0xff] %v509
        %519 = vst [vmem:[#allocation3 + $0x50] sm:$0xf] %v510
        %520 = vst [vmem:[#allocation3 + $0x54] sm:$0xff] %v512
        %521 = vst [vmem:[#allocation3 + $0x5c] sm:$0xf] %v513
        %v522 = vld [vmem:[#allocation2] sm:$0xff]
        %v523 = vld [vmem:[#allocation2 + $0x8] sm:$0xff]
        %v524 = vld [vmem:[#allocation2 + $0x10] sm:$0xff]
        %v525 = vld [vmem:[#allocation2 + $0x18] sm:$0xff]
        %530 = vrot.lane.b32.xlu0 %v522, 109
        %v531 = vpop.permute.xlu0 %530
        %532 = vrot.lane.b32.xlu0 %v523, 109
        %v533 = vpop.permute.xlu0 %532
        %534 = vrot.lane.b32.xlu0 %v524, 109
        %v535 = vpop.permute.xlu0 %534
        %536 = vrot.lane.b32.xlu0 %v525, 109
        %v537 = vpop.permute.xlu0 %536
        %v538 = vrot.slane %v531, 4
        %v539 = vrot.slane %v533, 4
        %v540 = vrot.slane %v535, 4
        %v541 = vrot.slane %v537, 4
        %v542 = vsel %vm436, %v538, %v539
        %vm543 = vcmask 891904
        %v544 = vsel %vm543, %v531, %v542
        %v545 = vsel %vm543, %v533, %v539
        %v546 = vsel %vm436, %v540, %v541
        %v547 = vsel %vm543, %v535, %v546
        %v548 = vsel %vm543, %v537, %v541
        %553 = vst [vmem:[#allocation3 + $0x60] sm:$0xff] %v544
        %554 = vst [vmem:[#allocation3 + $0x68] sm:$0xf] %v545
        %555 = vst [vmem:[#allocation3 + $0x6c] sm:$0xff] %v547
        %556 = vst [vmem:[#allocation3 + $0x74] sm:$0xf] %v548
        %v557 = vld [vmem:[#allocation2] sm:$0xff]
        %v558 = vld [vmem:[#allocation2 + $0x8] sm:$0xff]
        %v559 = vld [vmem:[#allocation2 + $0x10] sm:$0xff]
        %v560 = vld [vmem:[#allocation2 + $0x18] sm:$0xff]
        %565 = vrot.lane.b32.xlu0 %v557, 108
        %v566 = vpop.permute.xlu0 %565
        %567 = vrot.lane.b32.xlu0 %v558, 108
        %v568 = vpop.permute.xlu0 %567
        %569 = vrot.lane.b32.xlu0 %v559, 108
        %v570 = vpop.permute.xlu0 %569
        %571 = vrot.lane.b32.xlu0 %v560, 108
        %v572 = vpop.permute.xlu0 %571
        %v573 = vrot.slane %v566, 4
        %v574 = vrot.slane %v568, 4
        %v575 = vrot.slane %v570, 4
        %v576 = vrot.slane %v572, 4
        %v577 = vsel %vm436, %v573, %v574
        %vm578 = vcmask 883712
        %v579 = vsel %vm578, %v566, %v577
        %v580 = vsel %vm578, %v568, %v574
        %v581 = vsel %vm436, %v575, %v576
        %v582 = vsel %vm578, %v570, %v581
        %v583 = vsel %vm578, %v572, %v576
        %588 = vst [vmem:[#allocation3 + $0x78] sm:$0xff] %v579
        %589 = vst [vmem:[#allocation3 + $0x80] sm:$0xf] %v580
        %590 = vst [vmem:[#allocation3 + $0x84] sm:$0xff] %v582
        %591 = vst [vmem:[#allocation3 + $0x8c] sm:$0xf] %v583
        %v592 = vld [vmem:[#allocation2] sm:$0xff]
        %v593 = vld [vmem:[#allocation2 + $0x8] sm:$0xff]
        %v594 = vld [vmem:[#allocation2 + $0x10] sm:$0xff]
        %v595 = vld [vmem:[#allocation2 + $0x18] sm:$0xff]
        %600 = vrot.lane.b32.xlu0 %v592, 92
        %v601 = vpop.permute.xlu0 %600
        %602 = vrot.lane.b32.xlu0 %v593, 92
        %v603 = vpop.permute.xlu0 %602
        %604 = vrot.lane.b32.xlu0 %v594, 92
        %v605 = vpop.permute.xlu0 %604
        %606 = vrot.lane.b32.xlu0 %v595, 92
        %v607 = vpop.permute.xlu0 %606
        %v608 = vrot.slane %v601, 4
        %v609 = vrot.slane %v603, 4
        %v610 = vrot.slane %v605, 4
        %v611 = vrot.slane %v607, 4
        %v612 = vsel %vm436, %v608, %v609
        %vm613 = vcmask 752640
        %v614 = vsel %vm613, %v601, %v612
        %v615 = vsel %vm613, %v603, %v609
        %v616 = vsel %vm436, %v610, %v611
        %v617 = vsel %vm613, %v605, %v616
        %v618 = vsel %vm613, %v607, %v611
        %623 = vst [vmem:[#allocation3 + $0x90] sm:$0xff] %v614
        %624 = vst [vmem:[#allocation3 + $0x98] sm:$0xf] %v615
        %625 = vst [vmem:[#allocation3 + $0x9c] sm:$0xff] %v617
        %626 = vst [vmem:[#allocation3 + $0xa4] sm:$0xf] %v618
        %v627 = vld [vmem:[#allocation2] sm:$0xff]
        %v628 = vld [vmem:[#allocation2 + $0x8] sm:$0xff]
        %v629 = vld [vmem:[#allocation2 + $0x10] sm:$0xff]
        %v630 = vld [vmem:[#allocation2 + $0x18] sm:$0xff]
        %635 = vrot.lane.b32.xlu0 %v627, 91
        %v636 = vpop.permute.xlu0 %635
        %637 = vrot.lane.b32.xlu0 %v628, 91
        %v638 = vpop.permute.xlu0 %637
        %639 = vrot.lane.b32.xlu0 %v629, 91
        %v640 = vpop.permute.xlu0 %639
        %641 = vrot.lane.b32.xlu0 %v630, 91
        %v642 = vpop.permute.xlu0 %641
        %v643 = vrot.slane %v636, 4
        %v644 = vrot.slane %v638, 4
        %v645 = vrot.slane %v640, 4
        %v646 = vrot.slane %v642, 4
        %v647 = vsel %vm436, %v643, %v644
        %vm648 = vcmask 744448
        %v649 = vsel %vm648, %v636, %v647
        %v650 = vsel %vm648, %v638, %v644
        %v651 = vsel %vm436, %v645, %v646
        %v652 = vsel %vm648, %v640, %v651
        %v653 = vsel %vm648, %v642, %v646
        %658 = vst [vmem:[#allocation3 + $0xa8] sm:$0xff] %v649
        %659 = vst [vmem:[#allocation3 + $0xb0] sm:$0xf] %v650
        %660 = vst [vmem:[#allocation3 + $0xb4] sm:$0xff] %v652
        %661 = vst [vmem:[#allocation3 + $0xbc] sm:$0xf] %v653
        %v662 = vld [vmem:[#allocation2] sm:$0xff]
        %v663 = vld [vmem:[#allocation2 + $0x8] sm:$0xff]
        %v664 = vld [vmem:[#allocation2 + $0x10] sm:$0xff]
        %v665 = vld [vmem:[#allocation2 + $0x18] sm:$0xff]
        %670 = vrot.lane.b32.xlu0 %v662, 90
        %v671 = vpop.permute.xlu0 %670
        %672 = vrot.lane.b32.xlu0 %v663, 90
        %v673 = vpop.permute.xlu0 %672
        %674 = vrot.lane.b32.xlu0 %v664, 90
        %v675 = vpop.permute.xlu0 %674
        %676 = vrot.lane.b32.xlu0 %v665, 90
        %v677 = vpop.permute.xlu0 %676
        %v678 = vrot.slane %v671, 4
        %v679 = vrot.slane %v673, 4
        %v680 = vrot.slane %v675, 4
        %v681 = vrot.slane %v677, 4
        %v682 = vsel %vm436, %v678, %v679
        %vm683 = vcmask 736256
        %v684 = vsel %vm683, %v671, %v682
        %v685 = vsel %vm683, %v673, %v679
        %v686 = vsel %vm436, %v680, %v681
        %v687 = vsel %vm683, %v675, %v686
        %v688 = vsel %vm683, %v677, %v681
        %693 = vst [vmem:[#allocation3 + $0xc0] sm:$0xff] %v684
        %694 = vst [vmem:[#allocation3 + $0xc8] sm:$0xf] %v685
        %695 = vst [vmem:[#allocation3 + $0xcc] sm:$0xff] %v687
        %696 = vst [vmem:[#allocation3 + $0xd4] sm:$0xf] %v688
        %v697 = vld [vmem:[%s376] sm:$0xff]
        %v698 = vld [vmem:[#allocation3] sm:$0xff]
        %v699 = vld [vmem:[#allocation3 + $0x8] sm:$0xf]
        %v700 = vld [vmem:[#allocation3 + $0xc] sm:$0xff]
        %v701 = vld [vmem:[#allocation3 + $0x14] sm:$0xf]
        %v702 = vld [vmem:[#allocation3 + $0x18] sm:$0xff]
        %v703 = vld [vmem:[#allocation3 + $0x20] sm:$0xf]
        %v704 = vld [vmem:[#allocation3 + $0x24] sm:$0xff]
        %v705 = vld [vmem:[#allocation3 + $0x2c] sm:$0xf]
        %v706 = vld [vmem:[#allocation3 + $0x30] sm:$0xff]
        %v707 = vld [vmem:[#allocation3 + $0x38] sm:$0xf]
        %v708 = vld [vmem:[#allocation3 + $0x3c] sm:$0xff]
        %v709 = vld [vmem:[#allocation3 + $0x44] sm:$0xf]
        %v710 = vld [vmem:[#allocation3 + $0x48] sm:$0xff]
        %v711 = vld [vmem:[#allocation3 + $0x50] sm:$0xf]
        %v712 = vld [vmem:[#allocation3 + $0x54] sm:$0xff]
        %v713 = vld [vmem:[#allocation3 + $0x5c] sm:$0xf]
        %v714 = vld [vmem:[#allocation3 + $0x60] sm:$0xff]
        %v715 = vld [vmem:[#allocation3 + $0x68] sm:$0xf]
        %v716 = vld [vmem:[#allocation3 + $0x6c] sm:$0xff]
        %v717 = vld [vmem:[#allocation3 + $0x74] sm:$0xf]
        %v718 = vld [vmem:[#allocation3 + $0x78] sm:$0xff]
        %v719 = vld [vmem:[#allocation3 + $0x80] sm:$0xf]
        %v720 = vld [vmem:[#allocation3 + $0x84] sm:$0xff]
        %v721 = vld [vmem:[#allocation3 + $0x8c] sm:$0xf]
        %v722 = vld [vmem:[#allocation3 + $0x90] sm:$0xff]
        %v723 = vld [vmem:[#allocation3 + $0x98] sm:$0xf]
        %v724 = vld [vmem:[#allocation3 + $0x9c] sm:$0xff]
        %v725 = vld [vmem:[#allocation3 + $0xa4] sm:$0xf]
        %v726 = vld [vmem:[#allocation3 + $0xa8] sm:$0xff]
        %v727 = vld [vmem:[#allocation3 + $0xb0] sm:$0xf]
        %v728 = vld [vmem:[#allocation3 + $0xb4] sm:$0xff]
        %v729 = vld [vmem:[#allocation3 + $0xbc] sm:$0xf]
        %v730 = vld [vmem:[#allocation3 + $0xc0] sm:$0xff]
        %v731 = vld [vmem:[#allocation3 + $0xc8] sm:$0xf]
        %v732 = vld [vmem:[#allocation3 + $0xcc] sm:$0xff]
        %v733 = vld [vmem:[#allocation3 + $0xd4] sm:$0xf]
        %v734 = vld [vmem:[%s380] sm:$0xff]
        %736 = vset.pattern.permute.xlu0 0
        %737 = vperm.xlu0 %736, %v734
        %v738 = vpop.permute.xlu0 %737
        %v741 = vunpack.c.l.b16 %v697
        %v742 = vunpack.c.h.b16 %v697
        %v743 = vpack.c.b16 %v741, %v741
        %v744 = vpack.c.b16 %v742, %v742
        %v782 = vunpack.c.l.b16 %v698
        %v783 = vunpack.c.h.b16 %v698
        %v784 = vunpack.c.l.b16 %v699
        %v785 = vunpack.c.l.b16 %v700
        %v786 = vunpack.c.h.b16 %v700
        %v787 = vunpack.c.l.b16 %v701
        %v788 = vunpack.c.l.b16 %v702
        %v789 = vunpack.c.h.b16 %v702
        %v790 = vunpack.c.l.b16 %v703
        %v791 = vunpack.c.l.b16 %v704
        %v792 = vunpack.c.h.b16 %v704
        %v793 = vunpack.c.l.b16 %v705
        %v794 = vunpack.c.l.b16 %v706
        %v795 = vunpack.c.h.b16 %v706
        %v796 = vunpack.c.l.b16 %v707
        %v797 = vunpack.c.l.b16 %v708
        %v798 = vunpack.c.h.b16 %v708
        %v799 = vunpack.c.l.b16 %v709
        %v800 = vunpack.c.l.b16 %v710
        %v801 = vunpack.c.h.b16 %v710
        %v802 = vunpack.c.l.b16 %v711
        %v803 = vunpack.c.l.b16 %v712
        %v804 = vunpack.c.h.b16 %v712
        %v805 = vunpack.c.l.b16 %v713
        %v806 = vunpack.c.l.b16 %v714
        %v807 = vunpack.c.h.b16 %v714
        %v808 = vunpack.c.l.b16 %v715
        %v809 = vunpack.c.l.b16 %v716
        %v810 = vunpack.c.h.b16 %v716
        %v811 = vunpack.c.l.b16 %v717
        %v812 = vunpack.c.l.b16 %v718
        %v813 = vunpack.c.h.b16 %v718
        %v814 = vunpack.c.l.b16 %v719
        %v815 = vunpack.c.l.b16 %v720
        %v816 = vunpack.c.h.b16 %v720
        %v817 = vunpack.c.l.b16 %v721
        %v818 = vunpack.c.l.b16 %v722
        %v819 = vunpack.c.h.b16 %v722
        %v820 = vunpack.c.l.b16 %v723
        %v821 = vunpack.c.l.b16 %v724
        %v822 = vunpack.c.h.b16 %v724
        %v823 = vunpack.c.l.b16 %v725
        %v824 = vunpack.c.l.b16 %v726
        %v825 = vunpack.c.h.b16 %v726
        %v826 = vunpack.c.l.b16 %v727
        %v827 = vunpack.c.l.b16 %v728
        %v828 = vunpack.c.h.b16 %v728
        %v829 = vunpack.c.l.b16 %v729
        %v830 = vunpack.c.l.b16 %v730
        %v831 = vunpack.c.h.b16 %v730
        %v832 = vunpack.c.l.b16 %v731
        %v833 = vunpack.c.l.b16 %v732
        %v834 = vunpack.c.h.b16 %v732
        %v835 = vunpack.c.l.b16 %v733
        %v836 = vpack.c.b16 %v785, %v782
        %v837 = vpack.c.b16 %v786, %v783
        %v838 = vpack.c.b16 %v787, %v784
        %v839 = vpack.c.b16 %v791, %v788
        %v840 = vpack.c.b16 %v792, %v789
        %v841 = vpack.c.b16 %v793, %v790
        %v842 = vpack.c.b16 %v797, %v794
        %v843 = vpack.c.b16 %v798, %v795
        %v844 = vpack.c.b16 %v799, %v796
        %v845 = vpack.c.b16 %v803, %v800
        %v846 = vpack.c.b16 %v804, %v801
        %v847 = vpack.c.b16 %v805, %v802
        %v848 = vpack.c.b16 %v809, %v806
        %v849 = vpack.c.b16 %v810, %v807
        %v850 = vpack.c.b16 %v811, %v808
        %v851 = vpack.c.b16 %v815, %v812
        %v852 = vpack.c.b16 %v816, %v813
        %v853 = vpack.c.b16 %v817, %v814
        %v854 = vpack.c.b16 %v821, %v818
        %v855 = vpack.c.b16 %v822, %v819
        %v856 = vpack.c.b16 %v823, %v820
        %v857 = vpack.c.b16 %v827, %v824
        %v858 = vpack.c.b16 %v828, %v825
        %v859 = vpack.c.b16 %v829, %v826
        %v860 = vpack.c.b16 %v833, %v830
        %v861 = vpack.c.b16 %v834, %v831
        %v862 = vpack.c.b16 %v835, %v832
        %vm890 = vcmask 130048
        %v892 = vsel %vm890, %v744, 0
        %894 = vmatpush.bf16.msra.mxu0 %v857
        %895 = vmatpush.bf16.msra.mxu0 %v854
        %896 = vmatpush.bf16.msra.mxu0 %v851
        %897 = vmatpush.bf16.msra.mxu0 %v848
        %898 = vmatpush.bf16.msra.mxu0 %v845
        %899 = vmatpush.bf16.msra.mxu0 %v842
        %900 = vmatpush.bf16.msra.mxu0 %v839
        %901 = vmatpush.bf16.msra.mxu0 %v836
        %902 = vmatmul.bf16.gmra.mxu0 %v743
        %v903 = vpop.f32.mrf.mxu0
        %v904 = vadd.f32 %v738, %v903
        %v905 = vpop.f32.mrf.mxu0
        %906 = vdwg.mxu0
        %907 = vmatpush.bf16.msra.mxu0 0
        %908 = vmatpush.bf16.msra.mxu0 0
        %909 = vmatpush.bf16.msra.mxu0 0
        %910 = vmatpush.bf16.msra.mxu0 0
        %911 = vmatpush.bf16.msra.mxu0 0
        %912 = vmatpush.bf16.msra.mxu0 0
        %913 = vmatpush.bf16.msra.mxu0 0
        %914 = vmatpush.bf16.msra.mxu0 %v860
        %915 = vmatmul.bf16.gmra.mxu0 %v892
        %v916 = vpop.f32.mrf.mxu0
        %v917 = vadd.f32 %v904, %v916
        %v918 = vpop.f32.mrf.mxu0
        %919 = vdwg.mxu0
        %920 = vmatpush.bf16.msra.mxu0 %v858
        %921 = vmatpush.bf16.msra.mxu0 %v855
        %922 = vmatpush.bf16.msra.mxu0 %v852
        %923 = vmatpush.bf16.msra.mxu0 %v849
        %924 = vmatpush.bf16.msra.mxu0 %v846
        %925 = vmatpush.bf16.msra.mxu0 %v843
        %926 = vmatpush.bf16.msra.mxu0 %v840
        %927 = vmatpush.bf16.msra.mxu0 %v837
        %928 = vmatmul.bf16.gmra.mxu0 %v743
        %v929 = vpop.f32.mrf.mxu0
        %v930 = vadd.f32 %v738, %v929
        %v931 = vpop.f32.mrf.mxu0
        %932 = vdwg.mxu0
        %933 = vmatpush.bf16.msra.mxu0 0
        %934 = vmatpush.bf16.msra.mxu0 0
        %935 = vmatpush.bf16.msra.mxu0 0
        %936 = vmatpush.bf16.msra.mxu0 0
        %937 = vmatpush.bf16.msra.mxu0 0
        %938 = vmatpush.bf16.msra.mxu0 0
        %939 = vmatpush.bf16.msra.mxu0 0
        %940 = vmatpush.bf16.msra.mxu0 %v861
        %941 = vmatmul.bf16.gmra.mxu0 %v892
        %v942 = vpop.f32.mrf.mxu0
        %v943 = vadd.f32 %v930, %v942
        %v944 = vpop.f32.mrf.mxu0
        %945 = vdwg.mxu0
        %946 = vmatpush.bf16.msra.mxu0 %v859
        %947 = vmatpush.bf16.msra.mxu0 %v856
        %948 = vmatpush.bf16.msra.mxu0 %v853
        %949 = vmatpush.bf16.msra.mxu0 %v850
        %950 = vmatpush.bf16.msra.mxu0 %v847
        %951 = vmatpush.bf16.msra.mxu0 %v844
        %952 = vmatpush.bf16.msra.mxu0 %v841
        %953 = vmatpush.bf16.msra.mxu0 %v838
        %954 = vmatmul.bf16.gmra.mxu0 %v743
        %v955 = vpop.f32.mrf.mxu0
        %v956 = vadd.f32 %v738, %v955
        %v957 = vpop.f32.mrf.mxu0
        %958 = vdwg.mxu0
        %959 = vmatpush.bf16.msra.mxu0 0
        %960 = vmatpush.bf16.msra.mxu0 0
        %961 = vmatpush.bf16.msra.mxu0 0
        %962 = vmatpush.bf16.msra.mxu0 0
        %963 = vmatpush.bf16.msra.mxu0 0
        %964 = vmatpush.bf16.msra.mxu0 0
        %965 = vmatpush.bf16.msra.mxu0 0
        %966 = vmatpush.bf16.msra.mxu0 %v862
        %967 = vmatmul.bf16.gmra.mxu0 %v892
        %v968 = vpop.f32.mrf.mxu0
        %v969 = vadd.f32 %v956, %v968
        %v970 = vpop.f32.mrf.mxu0
        %971 = vdwg.mxu0
        %vm972 = vcmp.gt.f32.partialorder %v917, 0.0
        %vm973 = vcmp.gt.f32.partialorder %v943, 0.0
        %vm974 = vcmp.gt.f32.partialorder %v969, 0.0
        %v975 = vmul.f32 %v917, 0.1
        %v976 = vmul.f32 %v943, 0.1
        %v977 = vmul.f32 %v969, 0.1
        %v978 = vsel %vm972, %v917, %v975
        %v979 = vsel %vm973, %v943, %v976
        %v980 = vsel %vm974, %v969, %v977
        %v981 = vpack.c.bf16 %v979, %v978
        %v982 = vpack.c.bf16 %v980, %v980
        %983 = vst [vmem:[%s393] sm:$0xff] %v981
        %984 = vst [vmem:[%s393 + $0x8] sm:$0xf] %v982
        %s985 = smul.u32 3, %s22
        %p986 = scmp.lt.s32.totalorder %s20, 1
        %s987 = scalar_select %p986, %s20, 1
        %p988 = scmp.lt.s32.totalorder %s21, 0
        %s989 = scalar_select %p988, %s21, 0
        %p990 = scmp.lt.s32.totalorder %s985, 2
        %s991 = scalar_select %p990, %s985, 2
        %s992 = smul.addr %s989, 3
        %s993 = sadd.s32 %s991, %s992
        %s994 = smul.addr %s987, 3
        %s995 = sadd.s32 %s993, %s994
        %s996 = smul.addr %s995, 4
        %s997 = scalar_lea.vmem %s4, %s996
        // Predicated region
        $region104: #{conv_bn_lrelu.1} parent=94 // pred_check
          %p998 = pneg %p168
        $region105: #{conv_bn_lrelu.1} parent=94 // pred_check_branch
          %1000 = sbr.rel (%p998) target = $region107
        $region106: #{conv_bn_lrelu.1} parent=94 // pred_region
          %s1001 = smul.u32 3, %s22
        $region107: #{conv_bn_lrelu.1} parent=94 // pred_fallthru
          _
      $region95: #{conv_bn_lrelu.1} parent=5 // pred_fallthru
        _
      %p1002 = scmp.le.s32.totalorder 2, %s10
      // Predicated region
      $region108: #{conv_bn_lrelu.1} parent=5 // pred_check
        %p1003 = pneg %p1002
      $region109: #{conv_bn_lrelu.1} parent=5 // pred_check_branch
        %1005 = sbr.rel (%p1003) target = $region111
      $region110: #{conv_bn_lrelu.1} parent=5 // pred_region
        %s1006 = ssub.s32 %s10, 2
        // Predicated region
        $region112: #{conv_bn_lrelu.1} parent=110 // pred_check
          %p1007 = pneg %p174
        $region113: #{conv_bn_lrelu.1} parent=110 // pred_check_branch
          %1009 = sbr.rel (%p1007) target = $region115
        $region114: #{conv_bn_lrelu.1} parent=110 // pred_region
          %s1010 = smul.u32 3, %s25
          %p1011 = scmp.lt.s32.totalorder %s23, 1
          %s1012 = scalar_select %p1011, %s23, 1
          %p1013 = scmp.lt.s32.totalorder %s24, 0
          %s1014 = scalar_select %p1013, %s24, 0
          %p1015 = scmp.lt.s32.totalorder %s1010, 2
          %s1016 = scalar_select %p1015, %s1010, 2
          %s1017 = smul.addr %s1014, 3
          %s1018 = sadd.s32 %s1016, %s1017
          %s1019 = smul.addr %s1012, 3
          %s1020 = sadd.s32 %s1018, %s1019
          %s1021 = smul.addr %s1020, 4
          %s1022 = scalar_lea.vmem %s4, %s1021
        $region115: #{conv_bn_lrelu.1} parent=110 // pred_fallthru
          _
      $region111: #{conv_bn_lrelu.1} parent=5 // pred_fallthru
        _
    $region6: #{conv_bn_lrelu.1} parent=1 // loop_footer
      %s14 = sadd.s32 1, %s10
    $region7: #{conv_bn_lrelu.1} parent=1 // loop_footer_branch
      %9 = sbr.rel target = $region3
    $region8: #{conv_bn_lrelu.1} parent=1 // loop_exit
      _

</llo_original>
